<compile_context>
chip_gen: v5e
topology: v5e:2x2
jax: 0.10.0
libtpu: 0.0.40
codegen_flags: <defaults>
</compile_context>

<pallas_src>
import functools
import math

import jax
import jax.numpy as jnp
from jax.experimental import pallas as pl
from jax.experimental.pallas import tpu as pltpu


def _round_up(x, m):
    return ((x + m - 1) // m) * m


def _cdiv(a, b):
    return (a + b - 1) // b


def _spec(shape, index_map, buffers=None):
    """BlockSpec with an optional explicit buffer count.

    Falls back to default double-buffering if this JAX build does not support
    `pipeline_mode=pl.Buffered(n)`.
    """
    if buffers is not None:
        try:
            return pl.BlockSpec(shape, index_map, pipeline_mode=pl.Buffered(buffers))
        except Exception:  # older JAX: no Buffered / pipeline_mode kwarg
            pass
    return pl.BlockSpec(shape, index_map)


# ------------------------------- kernels ----------------------------------- #
def _ffn_fused_kernel(x_ref, w1_ref, b1_ref, w2_ref, b2_ref, w3_ref, b3_ref,
                      o_ref):
    """All three layers for one batch tile; every weight is VMEM-resident."""
    h1 = jnp.dot(x_ref[...], w1_ref[...], preferred_element_type=jnp.float32)
    h1 = jnp.maximum(h1 + b1_ref[...], 0.0)
    h2 = jnp.dot(h1.astype(jnp.bfloat16), w2_ref[...],
                 preferred_element_type=jnp.float32)
    h2 = jnp.maximum(h2 + b2_ref[...], 0.0)
    h3 = jnp.dot(h2.astype(jnp.bfloat16), w3_ref[...],
                 preferred_element_type=jnp.float32)
    o_ref[...] = (h3 + b3_ref[...]).astype(o_ref.dtype)


def _ffn_stream_kernel(x_ref, w1_ref, b1_ref, w2_ref, b2_ref, w3_ref, b3_ref,
                       o_ref, h2_acc):
    """Hidden dim streamed over grid axis 1 (reduction axis, innermost).

    Per grid point (i, k):
        h1_k    = relu(x_i @ w1[:, k_tile] + b1[k_tile])
        h2_acc += h1_k @ w2[k_tile, :]              (f32 accumulation)
    On the last k:
        out_i   = relu(h2_acc + b2) @ w3 + b3
    """
    k = pl.program_id(1)

    @pl.when(k == 0)
    def _():
        h2_acc[...] = jnp.zeros_like(h2_acc)

    h1 = jnp.dot(x_ref[...], w1_ref[...], preferred_element_type=jnp.float32)
    h1 = jnp.maximum(h1 + b1_ref[...], 0.0)
    h2_acc[...] += jnp.dot(h1.astype(jnp.bfloat16), w2_ref[...],
                           preferred_element_type=jnp.float32)

    @pl.when(k == pl.num_programs(1) - 1)
    def _():
        h2 = jnp.maximum(h2_acc[...] + b2_ref[...], 0.0)
        h3 = jnp.dot(h2.astype(jnp.bfloat16), w3_ref[...],
                     preferred_element_type=jnp.float32)
        o_ref[...] = (h3 + b3_ref[...]).astype(o_ref.dtype)


# ------------------------------ tile planning ------------------------------- #
def _plan_tiles(B, D, H, O_pad, hidden_tile):
    """Generation-aware tile plan. Returns (tm, B_pad, th, H_pad, fused, vmem_limit)."""
    try:
        vmem_cap = int(pltpu.get_tpu_info().vmem_capacity_bytes)
    except Exception:
        vmem_cap = 64 << 20                    # conservative fallback (v7x-sized)
    budget = (vmem_cap * 3) // 4               # plan tiles against ~75% of physical
    vmem_limit = (vmem_cap * 7) // 8           # give the compiler slack below physical
    headroom = 4 << 20                         # compiler internal scratch, etc.

    # Batch tile: 256 rows on big batches (256-row MXU on v6e/v7x), otherwise
    # split into >=2 tiles so the "parallel" axis can feed both v7x TensorCores.
    if B >= 512:
        tm = 256
    elif B >= 256:
        tm = 128
    elif B >= 16:
        tm = _round_up(_cdiv(B, 2), 8)
    else:
        tm = B                                 # tiny batch: one full-size block
    B_pad = _round_up(B, tm)

    H128 = _round_up(H, 128)

    # Fully fused plan: every weight resident (single-buffered), x / out
    # pipelined over batch, plus f32 temporaries for h1 / h2.
    fused_bytes = (2 * tm * D * 2                    # x (bf16, double-buffered)
                   + D * H128 * 2 + H128 * 4         # w1, b1
                   + H128 * D * 2 + D * 4            # w2, b2
                   + D * O_pad * 2 + O_pad * 4       # w3, b3
                   + 2 * tm * O_pad * 4              # out (f32, double-buffered)
                   + tm * H128 * 4 + tm * D * 4)     # h1 / h2 f32 temporaries

    if hidden_tile is not None:
        th = min(_round_up(hidden_tile, 128), H128)
    elif fused_bytes + headroom <= budget:
        th = H128                                    # collapse the hidden grid
    else:
        # Streaming plan: grow the hidden tile until the budget is full.
        resident = (tm * D * 2                       # x (bf16, k-resident)
                    + D * 4 + O_pad * 4              # b2, b3
                    + D * O_pad * 2                  # w3 (single-buffered)
                    + 2 * tm * O_pad * 4             # out (double-buffered)
                    + 2 * tm * D * 4)                # h2 accumulator + temp
        per_th = 2 * (2 * D * 2 + 4) + tm * 4        # 2x-buffered w1 col + w2 row + b1, h1 temp
        th = (budget - headroom - resident) // per_th
        th = max(128, (th // 128) * 128)
        th = min(th, H128)

    fused = th >= H128
    H_pad = H128 if fused else _round_up(H, th)
    return tm, B_pad, th, H_pad, fused, vmem_limit


# --------------------------------- wrapper ---------------------------------- #
@functools.partial(jax.jit,
                   static_argnames=("num_feat_cols", "x_dim", "y_dim", "hidden_tile"))
def feed_forward(x, params, *, num_feat_cols, x_dim, y_dim, hidden_tile=None):
    """JAX wrapper reproducing FeedForward.forward.

    x: (B, C, T, X, Y) float32 with C = num_feat_cols + num_stat_cols.
    params: dict with w1 (D,2D), b1 (1,2D), w2 (2D,D), b2 (1,D),
            w3 (D,O), b3 (1,O)  -- weights stored as (in, out) so the kernel
            computes y = x @ W + b (== torch's x @ W.T + b).
    Returns (B, 1, num_feat_cols, X, Y) float32.
    """
    B = x.shape[0]
    D = math.prod(x.shape[1:])                 # base_dim
    H = 2 * D                                  # hidden width
    O = num_feat_cols * 1 * x_dim * y_dim      # out features
    O_pad = _round_up(O, 128)                  # lane-dense output slab

    tm, B_pad, th, H_pad, fused, vmem_limit = _plan_tiles(B, D, H, O_pad, hidden_tile)
    nbt = B_pad // tm

    # torch.flatten(x, 1, 4); cast to bf16 once here (MXU input dtype).
    x2d = x.reshape(B, D).astype(jnp.bfloat16)
    if B_pad != B:
        x2d = jnp.pad(x2d, ((0, B_pad - B), (0, 0)))

    # bf16 weights (halve HBM/VMEM traffic); biases stay f32.
    w1 = params["w1"].astype(jnp.bfloat16)
    w2 = params["w2"].astype(jnp.bfloat16)
    w3 = params["w3"].astype(jnp.bfloat16)
    b1 = params["b1"].astype(jnp.float32)
    b2 = params["b2"].astype(jnp.float32)
    b3 = params["b3"].astype(jnp.float32)

    if H_pad != H:   # zero-pad hidden dim: relu(0 + 0) = 0, contributes nothing
        w1 = jnp.pad(w1, ((0, 0), (0, H_pad - H)))
        b1 = jnp.pad(b1, ((0, 0), (0, H_pad - H)))
        w2 = jnp.pad(w2, ((0, H_pad - H), (0, 0)))
    if O_pad != O:   # zero-pad output features, sliced off below
        w3 = jnp.pad(w3, ((0, 0), (0, O_pad - O)))
        b3 = jnp.pad(b3, ((0, 0), (0, O_pad - O)))

    # TODO(synk): tile w3/b3 over an output-feature grid axis for very large
    # D*O (not needed at these model sizes; it would also give a second
    # parallel axis for v7x when batch tiles are scarce).
    if fused:
        grid = (nbt,)
        in_specs = [
            _spec((tm, D), lambda i: (i, 0)),                  # x: streamed over batch
            _spec((D, H_pad), lambda i: (0, 0), buffers=1),    # resident weights:
            _spec((1, H_pad), lambda i: (0, 0), buffers=1),    #   single-buffered,
            _spec((H_pad, D), lambda i: (0, 0), buffers=1),    #   fetched once
            _spec((1, D), lambda i: (0, 0), buffers=1),
            _spec((D, O_pad), lambda i: (0, 0), buffers=1),
            _spec((1, O_pad), lambda i: (0, 0), buffers=1),
        ]
        out_specs = pl.BlockSpec((tm, O_pad), lambda i: (i, 0))
        scratch_shapes = []
        kernel = _ffn_fused_kernel
        dim_sems = ("parallel",)
        streamed_mult = 1
    else:
        nk = H_pad // th
        grid = (nbt, nk)
        in_specs = [
            _spec((tm, D), lambda i, k: (i, 0)),               # x: k-resident
            _spec((D, th), lambda i, k: (0, k)),               # w1: streamed over hidden
            _spec((1, th), lambda i, k: (0, k)),               # b1: streamed over hidden
            _spec((th, D), lambda i, k: (k, 0)),               # w2: streamed over hidden
            _spec((1, D), lambda i, k: (0, 0), buffers=1),     # b2: grid-resident
            _spec((D, O_pad), lambda i, k: (0, 0), buffers=1), # w3: grid-resident
            _spec((1, O_pad), lambda i, k: (0, 0), buffers=1), # b3: grid-resident
        ]
        out_specs = pl.BlockSpec((tm, O_pad), lambda i, k: (i, 0))
        scratch_shapes = [pltpu.VMEM((tm, D), jnp.float32)]
        kernel = _ffn_stream_kernel
        dim_sems = ("parallel", "arbitrary")
        streamed_mult = nbt                                    # weights re-streamed per batch tile

    flops = 2 * B_pad * (D * H_pad + H_pad * D + D * O_pad)
    streamed_bytes = w1.size * 2 + b1.size * 4 + w2.size * 2
    const_bytes = b2.size * 4 + w3.size * 2 + b3.size * 4
    bytes_accessed = int(x2d.size * 2 + B_pad * O_pad * 4
                         + streamed_mult * streamed_bytes + const_bytes)

    y2d = pl.pallas_call(
        kernel,
        out_shape=jax.ShapeDtypeStruct((B_pad, O_pad), jnp.float32),
        grid_spec=pltpu.PrefetchScalarGridSpec(
            num_scalar_prefetch=0,
            grid=grid,
            in_specs=in_specs,
            out_specs=out_specs,
            scratch_shapes=scratch_shapes),
        compiler_params=pltpu.CompilerParams(
            dimension_semantics=dim_sems,
            vmem_limit_bytes=int(vmem_limit)),
        cost_estimate=pl.CostEstimate(flops=flops, transcendentals=0,
                                      bytes_accessed=bytes_accessed),
    )(x2d, w1, b1, w2, b2, w3, b3)

    return y2d[:B, :O].reshape(B, 1, num_feat_cols, x_dim, y_dim)


# ------------------------ deterministic parameter init --------------------- #
def init_params(key, base_dim, out_dim):
    """Mimic nn.Linear default init (uniform +-1/sqrt(fan_in)), deterministic."""
    ks = jax.random.split(key, 6)

    def lin(kw, kb, fan_in, fan_out):
        bound = 1.0 / jnp.sqrt(fan_in)
        # stored as (in, out) so the kernel does x @ W directly
        w = jax.random.uniform(kw, (fan_in, fan_out), jnp.float32, -bound, bound)
        b = jax.random.uniform(kb, (1, fan_out), jnp.float32, -bound, bound)
        return w, b

    w1, b1 = lin(ks[0], ks[1], base_dim, base_dim * 2)
    w2, b2 = lin(ks[2], ks[3], base_dim * 2, base_dim)
    w3, b3 = lin(ks[4], ks[5], base_dim, out_dim)
    return {"w1": w1, "b1": b1, "w2": w2, "b2": b2, "w3": w3, "b3": b3}


# ---------------------------------- demo ----------------------------------- #
if __name__ == "__main__":
    # Small synthetic config (analogue of `config` in the PyTorch module).
    num_feat_cols = 2
    num_stat_cols = 2
    context_len = 2
    x_dim = 4
    y_dim = 8

    C = num_feat_cols + num_stat_cols
    base_dim = C * context_len * x_dim * y_dim          # 4*2*4*8 = 256
    out_dim = num_feat_cols * 1 * x_dim * y_dim         # 2*4*8   = 64

    key = jax.random.PRNGKey(0)
    k_x1, k_x2, k_p = jax.random.split(key, 3)
    params = init_params(k_p, base_dim, out_dim)

    # Plain-JAX reference with the same bf16 weight/input cast, f32 accumulation.
    def reference(x):
        B = x.shape[0]
        x2d = x.reshape(B, base_dim).astype(jnp.bfloat16)
        h = jnp.dot(x2d, params["w1"].astype(jnp.bfloat16),
                    preferred_element_type=jnp.float32) + params["b1"]
        h = jnp.maximum(h, 0.0)
        h = jnp.dot(h.astype(jnp.bfloat16), params["w2"].astype(jnp.bfloat16),
                    preferred_element_type=jnp.float32) + params["b2"]
        h = jnp.maximum(h, 0.0)
        y = jnp.dot(h.astype(jnp.bfloat16), params["w3"].astype(jnp.bfloat16),
                    preferred_element_type=jnp.float32) + params["b3"]
        return y.reshape(B, 1, num_feat_cols, x_dim, y_dim)

    # 1) Small batch -> fused single-pass kernel (all weights VMEM-resident).
    x_small = jax.random.normal(k_x1, (2, C, context_len, x_dim, y_dim), jnp.float32)
    out_small = jax.block_until_ready(
        feed_forward(x_small, params,
                     num_feat_cols=num_feat_cols, x_dim=x_dim, y_dim=y_dim))
    assert out_small.shape == (2, 1, num_feat_cols, x_dim, y_dim)
    assert jnp.allclose(out_small, reference(x_small), atol=2e-2, rtol=2e-2)

    # 2) Larger batch + forced small hidden tile -> exercises the streaming
    #    (accumulator) kernel and the multi-tile "parallel" batch axis.
    x_big = jax.random.normal(k_x2, (32, C, context_len, x_dim, y_dim), jnp.float32)
    out_big = jax.block_until_ready(
        feed_forward(x_big, params, num_feat_cols=num_feat_cols,
                     x_dim=x_dim, y_dim=y_dim, hidden_tile=128))
    assert out_big.shape == (32, 1, num_feat_cols, x_dim, y_dim)
    assert jnp.allclose(out_big, reference(x_big), atol=2e-2, rtol=2e-2)

    print("KERNEL_OK")
</pallas_src>

<mosaic_0001>
module attributes {stable_mosaic.version = 11 : i64} {
  func.func @_ffn_fused_kernel(%arg0: i32, %arg1: memref<2x256xbf16, #tpu.memory_space<vmem>>, %arg2: memref<256x512xbf16, #tpu.memory_space<vmem>>, %arg3: memref<1x512xf32, #tpu.memory_space<vmem>>, %arg4: memref<512x256xbf16, #tpu.memory_space<vmem>>, %arg5: memref<1x256xf32, #tpu.memory_space<vmem>>, %arg6: memref<256x128xbf16, #tpu.memory_space<vmem>>, %arg7: memref<1x128xf32, #tpu.memory_space<vmem>>, %arg8: memref<2x128xf32, #tpu.memory_space<vmem>>) attributes {dimension_semantics = [#tpu.dimension_semantics<parallel>], iteration_bounds = array<i64: 1>, scalar_prefetch = 0 : i64, scratch_operands = 0 : i64, tpu.core_type = #tpu.core_type<tc>, window_params = [{transform_indices = @transform_0, window_bounds = array<i64: 2, 256>}, {pipeline_mode = #tpu.pipeline_mode<synchronous>, transform_indices = @transform_1, window_bounds = array<i64: 256, 512>}, {pipeline_mode = #tpu.pipeline_mode<synchronous>, transform_indices = @transform_2, window_bounds = array<i64: 1, 512>}, {pipeline_mode = #tpu.pipeline_mode<synchronous>, transform_indices = @transform_3, window_bounds = array<i64: 512, 256>}, {pipeline_mode = #tpu.pipeline_mode<synchronous>, transform_indices = @transform_4, window_bounds = array<i64: 1, 256>}, {pipeline_mode = #tpu.pipeline_mode<synchronous>, transform_indices = @transform_5, window_bounds = array<i64: 256, 128>}, {pipeline_mode = #tpu.pipeline_mode<synchronous>, transform_indices = @transform_6, window_bounds = array<i64: 1, 128>}, {transform_indices = @transform_7, window_bounds = array<i64: 2, 128>}]} {
    %c0 = arith.constant 0 : index
    %c0_0 = arith.constant 0 : index
    %0 = vector.load %arg1[%c0, %c0_0] : memref<2x256xbf16, #tpu.memory_space<vmem>>, vector<2x256xbf16>
    %c0_1 = arith.constant 0 : index
    %c0_2 = arith.constant 0 : index
    %1 = vector.load %arg2[%c0_1, %c0_2] : memref<256x512xbf16, #tpu.memory_space<vmem>>, vector<256x512xbf16>
    %cst = arith.constant dense<0.000000e+00> : vector<2x512xf32>
    %2 = tpu.matmul %0, %1, %cst {dimension_numbers = #tpu.dot_dimension_numbers<[1], [0], [0], [1], [0, 0, 1, 1], [], []>} : vector<2x256xbf16>, vector<256x512xbf16>, vector<2x512xf32> -> vector<2x512xf32>
    %c0_3 = arith.constant 0 : index
    %c0_4 = arith.constant 0 : index
    %3 = vector.load %arg3[%c0_3, %c0_4] : memref<1x512xf32, #tpu.memory_space<vmem>>, vector<1x512xf32>
    %4 = vector.broadcast %3 : vector<1x512xf32> to vector<2x512xf32>
    %5 = arith.addf %2, %4 : vector<2x512xf32>
    %cst_5 = arith.constant 0.000000e+00 : f32
    %6 = vector.broadcast %cst_5 : f32 to vector<2x512xf32>
    %7 = arith.maximumf %5, %6 : vector<2x512xf32>
    %8 = arith.truncf %7 : vector<2x512xf32> to vector<2x512xbf16>
    %c0_6 = arith.constant 0 : index
    %c0_7 = arith.constant 0 : index
    %9 = vector.load %arg4[%c0_6, %c0_7] : memref<512x256xbf16, #tpu.memory_space<vmem>>, vector<512x256xbf16>
    %cst_8 = arith.constant dense<0.000000e+00> : vector<2x256xf32>
    %10 = tpu.matmul %8, %9, %cst_8 {dimension_numbers = #tpu.dot_dimension_numbers<[1], [0], [0], [1], [0, 0, 1, 1], [], []>} : vector<2x512xbf16>, vector<512x256xbf16>, vector<2x256xf32> -> vector<2x256xf32>
    %c0_9 = arith.constant 0 : index
    %c0_10 = arith.constant 0 : index
    %11 = vector.load %arg5[%c0_9, %c0_10] : memref<1x256xf32, #tpu.memory_space<vmem>>, vector<1x256xf32>
    %12 = vector.broadcast %11 : vector<1x256xf32> to vector<2x256xf32>
    %13 = arith.addf %10, %12 : vector<2x256xf32>
    %cst_11 = arith.constant 0.000000e+00 : f32
    %14 = vector.broadcast %cst_11 : f32 to vector<2x256xf32>
    %15 = arith.maximumf %13, %14 : vector<2x256xf32>
    %16 = arith.truncf %15 : vector<2x256xf32> to vector<2x256xbf16>
    %c0_12 = arith.constant 0 : index
    %c0_13 = arith.constant 0 : index
    %17 = vector.load %arg6[%c0_12, %c0_13] : memref<256x128xbf16, #tpu.memory_space<vmem>>, vector<256x128xbf16>
    %cst_14 = arith.constant dense<0.000000e+00> : vector<2x128xf32>
    %18 = tpu.matmul %16, %17, %cst_14 {dimension_numbers = #tpu.dot_dimension_numbers<[1], [0], [0], [1], [0, 0, 1, 1], [], []>} : vector<2x256xbf16>, vector<256x128xbf16>, vector<2x128xf32> -> vector<2x128xf32>
    %c0_15 = arith.constant 0 : index
    %c0_16 = arith.constant 0 : index
    %19 = vector.load %arg7[%c0_15, %c0_16] : memref<1x128xf32, #tpu.memory_space<vmem>>, vector<1x128xf32>
    %20 = vector.broadcast %19 : vector<1x128xf32> to vector<2x128xf32>
    %21 = arith.addf %18, %20 : vector<2x128xf32>
    %c0_17 = arith.constant 0 : index
    %c0_18 = arith.constant 0 : index
    %22 = vector.load %arg8[%c0_17, %c0_18] : memref<2x128xf32, #tpu.memory_space<vmem>>, vector<2x128xf32>
    tpu.vector_store %arg8[%c0_17, %c0_18], %21 {strides = array<i32>} : memref<2x128xf32, #tpu.memory_space<vmem>>, vector<2x128xf32>,
    return
  }
  func.func @transform_0(%arg0: i32) -> (i32, i32) {
    %c0_i32 = arith.constant 0 : i32
    %c0_i32_0 = arith.constant 0 : i32
    return %arg0, %c0_i32 : i32, i32
  }
  func.func @transform_1(%arg0: i32) -> (i32, i32) {
    %c0_i32 = arith.constant 0 : i32
    %c0_i32_0 = arith.constant 0 : i32
    %c0_i32_1 = arith.constant 0 : i32
    return %c0_i32, %c0_i32_0 : i32, i32
  }
  func.func @transform_2(%arg0: i32) -> (i32, i32) {
    %c0_i32 = arith.constant 0 : i32
    %c0_i32_0 = arith.constant 0 : i32
    %c0_i32_1 = arith.constant 0 : i32
    return %c0_i32, %c0_i32_0 : i32, i32
  }
  func.func @transform_3(%arg0: i32) -> (i32, i32) {
    %c0_i32 = arith.constant 0 : i32
    %c0_i32_0 = arith.constant 0 : i32
    %c0_i32_1 = arith.constant 0 : i32
    return %c0_i32, %c0_i32_0 : i32, i32
  }
  func.func @transform_4(%arg0: i32) -> (i32, i32) {
    %c0_i32 = arith.constant 0 : i32
    %c0_i32_0 = arith.constant 0 : i32
    %c0_i32_1 = arith.constant 0 : i32
    return %c0_i32, %c0_i32_0 : i32, i32
  }
  func.func @transform_5(%arg0: i32) -> (i32, i32) {
    %c0_i32 = arith.constant 0 : i32
    %c0_i32_0 = arith.constant 0 : i32
    %c0_i32_1 = arith.constant 0 : i32
    return %c0_i32, %c0_i32_0 : i32, i32
  }
  func.func @transform_6(%arg0: i32) -> (i32, i32) {
    %c0_i32 = arith.constant 0 : i32
    %c0_i32_0 = arith.constant 0 : i32
    %c0_i32_1 = arith.constant 0 : i32
    return %c0_i32, %c0_i32_0 : i32, i32
  }
  func.func @transform_7(%arg0: i32) -> (i32, i32) {
    %c0_i32 = arith.constant 0 : i32
    %c0_i32_0 = arith.constant 0 : i32
    return %arg0, %c0_i32 : i32, i32
  }
}

</mosaic_0001>

<llo_original>
// kernel: feed_forward.1
$region0: #{feed_forward.1}
  #allocation0 [shape = 'u32[]', space=smem, size = 0x4, offset = 0x4, fixed_abs, tag = 'smem constant byte address 0x4 - core index']
  #allocation1 [shape = 'u32[72,128]{1,0:T(1,128)}', space=vmem, size = 0x9000, scoped, tag = 'internal scratch']
  %s0 = inlined_call_operand.vmem [shape: bf16[2,256], index: 0, kind: input, shape index: {}]
  %s1 = inlined_call_operand.vmem [shape: bf16[256,512], index: 1, kind: input, shape index: {}]
  %s2 = inlined_call_operand.vmem [shape: f32[1,512], index: 2, kind: input, shape index: {}]
  %s3 = inlined_call_operand.vmem [shape: bf16[512,256], index: 3, kind: input, shape index: {}]
  %s4 = inlined_call_operand.vmem [shape: f32[1,256], index: 4, kind: input, shape index: {}]
  %s5 = inlined_call_operand.vmem [shape: bf16[256,128], index: 5, kind: input, shape index: {}]
  %s6 = inlined_call_operand.vmem [shape: f32[1,128], index: 6, kind: input, shape index: {}]
  %s7 = inlined_call_operand.vmem [shape: f32[2,128], index: 7, kind: output, shape index: {}]
  %s8 = sld [smem:[#allocation0]]
  $region38: #{feed_forward.1} parent=0
    _
  %s10 = ssub.s32 1, %s8
  %s11 = scalar_select 0, %s10, %s8
  // Predicated region
  $region2: #{feed_forward.1} parent=0 // pred_check
    _
  $region3: #{feed_forward.1} parent=0 // pred_check_branch
    %13 = sbr.rel (0) target = $region5
  $region4: #{feed_forward.1} parent=0 // pred_region
    _
  $region5: #{feed_forward.1} parent=0 // pred_fallthru
    _
  // Predicated region
  $region6: #{feed_forward.1} parent=0 // pred_check
    _
  $region7: #{feed_forward.1} parent=0 // pred_check_branch
    %15 = sbr.rel (0) target = $region9
  $region8: #{feed_forward.1} parent=0 // pred_region
    _
  $region9: #{feed_forward.1} parent=0 // pred_fallthru
    _
  // Predicated region
  $region10: #{feed_forward.1} parent=0 // pred_check
    _
  $region11: #{feed_forward.1} parent=0 // pred_check_branch
    %17 = sbr.rel (0) target = $region13
  $region12: #{feed_forward.1} parent=0 // pred_region
    _
  $region13: #{feed_forward.1} parent=0 // pred_fallthru
    _
  // Predicated region
  $region14: #{feed_forward.1} parent=0 // pred_check
    _
  $region15: #{feed_forward.1} parent=0 // pred_check_branch
    %19 = sbr.rel (0) target = $region17
  $region16: #{feed_forward.1} parent=0 // pred_region
    _
  $region17: #{feed_forward.1} parent=0 // pred_fallthru
    _
  // Predicated region
  $region18: #{feed_forward.1} parent=0 // pred_check
    _
  $region19: #{feed_forward.1} parent=0 // pred_check_branch
    %21 = sbr.rel (0) target = $region21
  $region20: #{feed_forward.1} parent=0 // pred_region
    _
  $region21: #{feed_forward.1} parent=0 // pred_fallthru
    _
  // Predicated region
  $region22: #{feed_forward.1} parent=0 // pred_check
    _
  $region23: #{feed_forward.1} parent=0 // pred_check_branch
    %23 = sbr.rel (0) target = $region25
  $region24: #{feed_forward.1} parent=0 // pred_region
    _
  $region25: #{feed_forward.1} parent=0 // pred_fallthru
    _
  // Predicated region
  $region26: #{feed_forward.1} parent=0 // pred_check
    _
  $region27: #{feed_forward.1} parent=0 // pred_check_branch
    %25 = sbr.rel (0) target = $region29
  $region28: #{feed_forward.1} parent=0 // pred_region
    _
  $region29: #{feed_forward.1} parent=0 // pred_fallthru
    _
  %v26 = vld [vmem:[%s0] sm:$0x3]
  %v27 = vld [vmem:[%s1] sm:$0xff]
  %v28 = vld [vmem:[%s1 + $0x8] sm:$0xff]
  %v29 = vld [vmem:[%s1 + $0x10] sm:$0xff]
  %v30 = vld [vmem:[%s1 + $0x18] sm:$0xff]
  %v31 = vld [vmem:[%s1 + $0x20] sm:$0xff]
  %v32 = vld [vmem:[%s1 + $0x28] sm:$0xff]
  %v33 = vld [vmem:[%s1 + $0x30] sm:$0xff]
  %v34 = vld [vmem:[%s1 + $0x38] sm:$0xff]
  %v35 = vld [vmem:[%s1 + $0x40] sm:$0xff]
  %v36 = vld [vmem:[%s1 + $0x48] sm:$0xff]
  %v37 = vld [vmem:[%s1 + $0x50] sm:$0xff]
  %v38 = vld [vmem:[%s1 + $0x58] sm:$0xff]
  %v39 = vld [vmem:[%s1 + $0x60] sm:$0xff]
  %v40 = vld [vmem:[%s1 + $0x68] sm:$0xff]
  %v41 = vld [vmem:[%s1 + $0x70] sm:$0xff]
  %v42 = vld [vmem:[%s1 + $0x78] sm:$0xff]
  %v43 = vld [vmem:[%s1 + $0x80] sm:$0xff]
  %v44 = vld [vmem:[%s1 + $0x88] sm:$0xff]
  %v45 = vld [vmem:[%s1 + $0x90] sm:$0xff]
  %v46 = vld [vmem:[%s1 + $0x98] sm:$0xff]
  %v47 = vld [vmem:[%s1 + $0xa0] sm:$0xff]
  %v48 = vld [vmem:[%s1 + $0xa8] sm:$0xff]
  %v49 = vld [vmem:[%s1 + $0xb0] sm:$0xff]
  %v50 = vld [vmem:[%s1 + $0xb8] sm:$0xff]
  %v51 = vld [vmem:[%s1 + $0xc0] sm:$0xff]
  %v52 = vld [vmem:[%s1 + $0xc8] sm:$0xff]
  %v53 = vld [vmem:[%s1 + $0xd0] sm:$0xff]
  %v54 = vld [vmem:[%s1 + $0xd8] sm:$0xff]
  %v55 = vld [vmem:[%s1 + $0xe0] sm:$0xff]
  %v56 = vld [vmem:[%s1 + $0xe8] sm:$0xff]
  %v57 = vld [vmem:[%s1 + $0xf0] sm:$0xff]
  %v58 = vld [vmem:[%s1 + $0xf8] sm:$0xff]
  %v59 = vld [vmem:[%s1 + $0x100] sm:$0xff]
  %v60 = vld [vmem:[%s1 + $0x108] sm:$0xff]
  %v61 = vld [vmem:[%s1 + $0x110] sm:$0xff]
  %v62 = vld [vmem:[%s1 + $0x118] sm:$0xff]
  %v63 = vld [vmem:[%s1 + $0x120] sm:$0xff]
  %v64 = vld [vmem:[%s1 + $0x128] sm:$0xff]
  %v65 = vld [vmem:[%s1 + $0x130] sm:$0xff]
  %v66 = vld [vmem:[%s1 + $0x138] sm:$0xff]
  %v67 = vld [vmem:[%s1 + $0x140] sm:$0xff]
  %v68 = vld [vmem:[%s1 + $0x148] sm:$0xff]
  %v69 = vld [vmem:[%s1 + $0x150] sm:$0xff]
  %v70 = vld [vmem:[%s1 + $0x158] sm:$0xff]
  %v71 = vld [vmem:[%s1 + $0x160] sm:$0xff]
  %v72 = vld [vmem:[%s1 + $0x168] sm:$0xff]
  %v73 = vld [vmem:[%s1 + $0x170] sm:$0xff]
  %v74 = vld [vmem:[%s1 + $0x178] sm:$0xff]
  %v75 = vld [vmem:[%s1 + $0x180] sm:$0xff]
  %v76 = vld [vmem:[%s1 + $0x188] sm:$0xff]
  %v77 = vld [vmem:[%s1 + $0x190] sm:$0xff]
  %v78 = vld [vmem:[%s1 + $0x198] sm:$0xff]
  %v79 = vld [vmem:[%s1 + $0x1a0] sm:$0xff]
  %v80 = vld [vmem:[%s1 + $0x1a8] sm:$0xff]
  %v81 = vld [vmem:[%s1 + $0x1b0] sm:$0xff]
  %v82 = vld [vmem:[%s1 + $0x1b8] sm:$0xff]
  %v83 = vld [vmem:[%s1 + $0x1c0] sm:$0xff]
  %v84 = vld [vmem:[%s1 + $0x1c8] sm:$0xff]
  %v85 = vld [vmem:[%s1 + $0x1d0] sm:$0xff]
  %v86 = vld [vmem:[%s1 + $0x1d8] sm:$0xff]
  %v87 = vld [vmem:[%s1 + $0x1e0] sm:$0xff]
  %v88 = vld [vmem:[%s1 + $0x1e8] sm:$0xff]
  %v89 = vld [vmem:[%s1 + $0x1f0] sm:$0xff]
  %v90 = vld [vmem:[%s1 + $0x1f8] sm:$0xff]
  %v91 = vld [vmem:[%s2] sm:$0xf]
  %v93 = vperm.slane %v91, 0
  %v94 = vperm.slane %v91, 1
  %v95 = vperm.slane %v91, 2
  %v96 = vperm.slane %v91, 3
  %102 = vst [vmem:[#allocation1] ss:$9 sm:$0xff] %v26
  %v103 = vld [vmem:[#allocation1] sm:$0xff]
  %v104 = vld [vmem:[#allocation1 + $0x9] sm:$0xff]
  %v171 = vunpack.c.l.b16 %v27
  %v172 = vunpack.c.h.b16 %v27
  %v173 = vunpack.c.l.b16 %v28
  %v174 = vunpack.c.h.b16 %v28
  %v175 = vunpack.c.l.b16 %v29
  %v176 = vunpack.c.h.b16 %v29
  %v177 = vunpack.c.l.b16 %v30
  %v178 = vunpack.c.h.b16 %v30
  %v179 = vunpack.c.l.b16 %v31
  %v180 = vunpack.c.h.b16 %v31
  %v181 = vunpack.c.l.b16 %v32
  %v182 = vunpack.c.h.b16 %v32
  %v183 = vunpack.c.l.b16 %v33
  %v184 = vunpack.c.h.b16 %v33
  %v185 = vunpack.c.l.b16 %v34
  %v186 = vunpack.c.h.b16 %v34
  %v187 = vunpack.c.l.b16 %v35
  %v188 = vunpack.c.h.b16 %v35
  %v189 = vunpack.c.l.b16 %v36
  %v190 = vunpack.c.h.b16 %v36
  %v191 = vunpack.c.l.b16 %v37
  %v192 = vunpack.c.h.b16 %v37
  %v193 = vunpack.c.l.b16 %v38
  %v194 = vunpack.c.h.b16 %v38
  %v195 = vunpack.c.l.b16 %v39
  %v196 = vunpack.c.h.b16 %v39
  %v197 = vunpack.c.l.b16 %v40
  %v198 = vunpack.c.h.b16 %v40
  %v199 = vunpack.c.l.b16 %v41
  %v200 = vunpack.c.h.b16 %v41
  %v201 = vunpack.c.l.b16 %v42
  %v202 = vunpack.c.h.b16 %v42
  %v203 = vunpack.c.l.b16 %v43
  %v204 = vunpack.c.h.b16 %v43
  %v205 = vunpack.c.l.b16 %v44
  %v206 = vunpack.c.h.b16 %v44
  %v207 = vunpack.c.l.b16 %v45
  %v208 = vunpack.c.h.b16 %v45
  %v209 = vunpack.c.l.b16 %v46
  %v210 = vunpack.c.h.b16 %v46
  %v211 = vunpack.c.l.b16 %v47
  %v212 = vunpack.c.h.b16 %v47
  %v213 = vunpack.c.l.b16 %v48
  %v214 = vunpack.c.h.b16 %v48
  %v215 = vunpack.c.l.b16 %v49
  %v216 = vunpack.c.h.b16 %v49
  %v217 = vunpack.c.l.b16 %v50
  %v218 = vunpack.c.h.b16 %v50
  %v219 = vunpack.c.l.b16 %v51
  %v220 = vunpack.c.h.b16 %v51
  %v221 = vunpack.c.l.b16 %v52
  %v222 = vunpack.c.h.b16 %v52
  %v223 = vunpack.c.l.b16 %v53
  %v224 = vunpack.c.h.b16 %v53
  %v225 = vunpack.c.l.b16 %v54
  %v226 = vunpack.c.h.b16 %v54
  %v227 = vunpack.c.l.b16 %v55
  %v228 = vunpack.c.h.b16 %v55
  %v229 = vunpack.c.l.b16 %v56
  %v230 = vunpack.c.h.b16 %v56
  %v231 = vunpack.c.l.b16 %v57
  %v232 = vunpack.c.h.b16 %v57
  %v233 = vunpack.c.l.b16 %v58
  %v234 = vunpack.c.h.b16 %v58
  %v235 = vunpack.c.l.b16 %v59
  %v236 = vunpack.c.h.b16 %v59
  %v237 = vunpack.c.l.b16 %v60
  %v238 = vunpack.c.h.b16 %v60
  %v239 = vunpack.c.l.b16 %v61
  %v240 = vunpack.c.h.b16 %v61
  %v241 = vunpack.c.l.b16 %v62
  %v242 = vunpack.c.h.b16 %v62
  %v243 = vunpack.c.l.b16 %v63
  %v244 = vunpack.c.h.b16 %v63
  %v245 = vunpack.c.l.b16 %v64
  %v246 = vunpack.c.h.b16 %v64
  %v247 = vunpack.c.l.b16 %v65
  %v248 = vunpack.c.h.b16 %v65
  %v249 = vunpack.c.l.b16 %v66
  %v250 = vunpack.c.h.b16 %v66
  %v251 = vunpack.c.l.b16 %v67
  %v252 = vunpack.c.h.b16 %v67
  %v253 = vunpack.c.l.b16 %v68
  %v254 = vunpack.c.h.b16 %v68
  %v255 = vunpack.c.l.b16 %v69
  %v256 = vunpack.c.h.b16 %v69
  %v257 = vunpack.c.l.b16 %v70
  %v258 = vunpack.c.h.b16 %v70
  %v259 = vunpack.c.l.b16 %v71
  %v260 = vunpack.c.h.b16 %v71
  %v261 = vunpack.c.l.b16 %v72
  %v262 = vunpack.c.h.b16 %v72
  %v263 = vunpack.c.l.b16 %v73
  %v264 = vunpack.c.h.b16 %v73
  %v265 = vunpack.c.l.b16 %v74
  %v266 = vunpack.c.h.b16 %v74
  %v267 = vunpack.c.l.b16 %v75
  %v268 = vunpack.c.h.b16 %v75
  %v269 = vunpack.c.l.b16 %v76
  %v270 = vunpack.c.h.b16 %v76
  %v271 = vunpack.c.l.b16 %v77
  %v272 = vunpack.c.h.b16 %v77
  %v273 = vunpack.c.l.b16 %v78
  %v274 = vunpack.c.h.b16 %v78
  %v275 = vunpack.c.l.b16 %v79
  %v276 = vunpack.c.h.b16 %v79
  %v277 = vunpack.c.l.b16 %v80
  %v278 = vunpack.c.h.b16 %v80
  %v279 = vunpack.c.l.b16 %v81
  %v280 = vunpack.c.h.b16 %v81
  %v281 = vunpack.c.l.b16 %v82
  %v282 = vunpack.c.h.b16 %v82
  %v283 = vunpack.c.l.b16 %v83
  %v284 = vunpack.c.h.b16 %v83
  %v285 = vunpack.c.l.b16 %v84
  %v286 = vunpack.c.h.b16 %v84
  %v287 = vunpack.c.l.b16 %v85
  %v288 = vunpack.c.h.b16 %v85
  %v289 = vunpack.c.l.b16 %v86
  %v290 = vunpack.c.h.b16 %v86
  %v291 = vunpack.c.l.b16 %v87
  %v292 = vunpack.c.h.b16 %v87
  %v293 = vunpack.c.l.b16 %v88
  %v294 = vunpack.c.h.b16 %v88
  %v295 = vunpack.c.l.b16 %v89
  %v296 = vunpack.c.h.b16 %v89
  %v297 = vunpack.c.l.b16 %v90
  %v298 = vunpack.c.h.b16 %v90
  %v299 = vpack.c.b16 %v175, %v171
  %v300 = vpack.c.b16 %v176, %v172
  %v301 = vpack.c.b16 %v177, %v173
  %v302 = vpack.c.b16 %v178, %v174
  %v303 = vpack.c.b16 %v183, %v179
  %v304 = vpack.c.b16 %v184, %v180
  %v305 = vpack.c.b16 %v185, %v181
  %v306 = vpack.c.b16 %v186, %v182
  %v307 = vpack.c.b16 %v191, %v187
  %v308 = vpack.c.b16 %v192, %v188
  %v309 = vpack.c.b16 %v193, %v189
  %v310 = vpack.c.b16 %v194, %v190
  %v311 = vpack.c.b16 %v199, %v195
  %v312 = vpack.c.b16 %v200, %v196
  %v313 = vpack.c.b16 %v201, %v197
  %v314 = vpack.c.b16 %v202, %v198
  %v315 = vpack.c.b16 %v207, %v203
  %v316 = vpack.c.b16 %v208, %v204
  %v317 = vpack.c.b16 %v209, %v205
  %v318 = vpack.c.b16 %v210, %v206
  %v319 = vpack.c.b16 %v215, %v211
  %v320 = vpack.c.b16 %v216, %v212
  %v321 = vpack.c.b16 %v217, %v213
  %v322 = vpack.c.b16 %v218, %v214
  %v323 = vpack.c.b16 %v223, %v219
  %v324 = vpack.c.b16 %v224, %v220
  %v325 = vpack.c.b16 %v225, %v221
  %v326 = vpack.c.b16 %v226, %v222
  %v327 = vpack.c.b16 %v231, %v227
  %v328 = vpack.c.b16 %v232, %v228
  %v329 = vpack.c.b16 %v233, %v229
  %v330 = vpack.c.b16 %v234, %v230
  %v331 = vpack.c.b16 %v239, %v235
  %v332 = vpack.c.b16 %v240, %v236
  %v333 = vpack.c.b16 %v241, %v237
  %v334 = vpack.c.b16 %v242, %v238
  %v335 = vpack.c.b16 %v247, %v243
  %v336 = vpack.c.b16 %v248, %v244
  %v337 = vpack.c.b16 %v249, %v245
  %v338 = vpack.c.b16 %v250, %v246
  %v339 = vpack.c.b16 %v255, %v251
  %v340 = vpack.c.b16 %v256, %v252
  %v341 = vpack.c.b16 %v257, %v253
  %v342 = vpack.c.b16 %v258, %v254
  %v343 = vpack.c.b16 %v263, %v259
  %v344 = vpack.c.b16 %v264, %v260
  %v345 = vpack.c.b16 %v265, %v261
  %v346 = vpack.c.b16 %v266, %v262
  %v347 = vpack.c.b16 %v271, %v267
  %v348 = vpack.c.b16 %v272, %v268
  %v349 = vpack.c.b16 %v273, %v269
  %v350 = vpack.c.b16 %v274, %v270
  %v351 = vpack.c.b16 %v279, %v275
  %v352 = vpack.c.b16 %v280, %v276
  %v353 = vpack.c.b16 %v281, %v277
  %v354 = vpack.c.b16 %v282, %v278
  %v355 = vpack.c.b16 %v287, %v283
  %v356 = vpack.c.b16 %v288, %v284
  %v357 = vpack.c.b16 %v289, %v285
  %v358 = vpack.c.b16 %v290, %v286
  %v359 = vpack.c.b16 %v295, %v291
  %v360 = vpack.c.b16 %v296, %v292
  %v361 = vpack.c.b16 %v297, %v293
  %v362 = vpack.c.b16 %v298, %v294
  %427 = vmatpush.bf16.msra.mxu0 %v327
  %428 = vmatpush.bf16.msra.mxu0 %v323
  %429 = vmatpush.bf16.msra.mxu0 %v319
  %430 = vmatpush.bf16.msra.mxu0 %v315
  %431 = vmatpush.bf16.msra.mxu0 %v311
  %432 = vmatpush.bf16.msra.mxu0 %v307
  %433 = vmatpush.bf16.msra.mxu0 %v303
  %434 = vmatpush.bf16.msra.mxu0 %v299
  %435 = vmatmul.bf16.gmra.mxu0 %v103
  %v436 = vpop.f32.mrf.mxu0
  %v437 = vadd.f32 %v93, %v436
  %v438 = vpop.f32.mrf.mxu0
  %439 = vdwg.mxu0
  %440 = vmatpush.bf16.msra.mxu0 %v359
  %441 = vmatpush.bf16.msra.mxu0 %v355
  %442 = vmatpush.bf16.msra.mxu0 %v351
  %443 = vmatpush.bf16.msra.mxu0 %v347
  %444 = vmatpush.bf16.msra.mxu0 %v343
  %445 = vmatpush.bf16.msra.mxu0 %v339
  %446 = vmatpush.bf16.msra.mxu0 %v335
  %447 = vmatpush.bf16.msra.mxu0 %v331
  %448 = vmatmul.bf16.gmra.mxu0 %v104
  %v449 = vpop.f32.mrf.mxu0
  %v450 = vadd.f32 %v437, %v449
  %v451 = vpop.f32.mrf.mxu0
  %452 = vdwg.mxu0
  %453 = vmatpush.bf16.msra.mxu0 %v328
  %454 = vmatpush.bf16.msra.mxu0 %v324
  %455 = vmatpush.bf16.msra.mxu0 %v320
  %456 = vmatpush.bf16.msra.mxu0 %v316
  %457 = vmatpush.bf16.msra.mxu0 %v312
  %458 = vmatpush.bf16.msra.mxu0 %v308
  %459 = vmatpush.bf16.msra.mxu0 %v304
  %460 = vmatpush.bf16.msra.mxu0 %v300
  %461 = vmatmul.bf16.gmra.mxu0 %v103
  %v462 = vpop.f32.mrf.mxu0
  %v463 = vadd.f32 %v94, %v462
  %v464 = vpop.f32.mrf.mxu0
  %465 = vdwg.mxu0
  %466 = vmatpush.bf16.msra.mxu0 %v360
  %467 = vmatpush.bf16.msra.mxu0 %v356
  %468 = vmatpush.bf16.msra.mxu0 %v352
  %469 = vmatpush.bf16.msra.mxu0 %v348
  %470 = vmatpush.bf16.msra.mxu0 %v344
  %471 = vmatpush.bf16.msra.mxu0 %v340
  %472 = vmatpush.bf16.msra.mxu0 %v336
  %473 = vmatpush.bf16.msra.mxu0 %v332
  %474 = vmatmul.bf16.gmra.mxu0 %v104
  %v475 = vpop.f32.mrf.mxu0
  %v476 = vadd.f32 %v463, %v475
  %v477 = vpop.f32.mrf.mxu0
  %478 = vdwg.mxu0
  %479 = vmatpush.bf16.msra.mxu0 %v329
  %480 = vmatpush.bf16.msra.mxu0 %v325
  %481 = vmatpush.bf16.msra.mxu0 %v321
  %482 = vmatpush.bf16.msra.mxu0 %v317
  %483 = vmatpush.bf16.msra.mxu0 %v313
  %484 = vmatpush.bf16.msra.mxu0 %v309
  %485 = vmatpush.bf16.msra.mxu0 %v305
  %486 = vmatpush.bf16.msra.mxu0 %v301
  %487 = vmatmul.bf16.gmra.mxu0 %v103
  %v488 = vpop.f32.mrf.mxu0
  %v489 = vadd.f32 %v95, %v488
  %v490 = vpop.f32.mrf.mxu0
  %491 = vdwg.mxu0
  %492 = vmatpush.bf16.msra.mxu0 %v361
  %493 = vmatpush.bf16.msra.mxu0 %v357
  %494 = vmatpush.bf16.msra.mxu0 %v353
  %495 = vmatpush.bf16.msra.mxu0 %v349
  %496 = vmatpush.bf16.msra.mxu0 %v345
  %497 = vmatpush.bf16.msra.mxu0 %v341
  %498 = vmatpush.bf16.msra.mxu0 %v337
  %499 = vmatpush.bf16.msra.mxu0 %v333
  %500 = vmatmul.bf16.gmra.mxu0 %v104
  %v501 = vpop.f32.mrf.mxu0
  %v502 = vadd.f32 %v489, %v501
  %v503 = vpop.f32.mrf.mxu0
  %504 = vdwg.mxu0
  %505 = vmatpush.bf16.msra.mxu0 %v330
  %506 = vmatpush.bf16.msra.mxu0 %v326
  %507 = vmatpush.bf16.msra.mxu0 %v322
  %508 = vmatpush.bf16.msra.mxu0 %v318
  %509 = vmatpush.bf16.msra.mxu0 %v314
  %510 = vmatpush.bf16.msra.mxu0 %v310
  %511 = vmatpush.bf16.msra.mxu0 %v306
  %512 = vmatpush.bf16.msra.mxu0 %v302
  %513 = vmatmul.bf16.gmra.mxu0 %v103
  %v514 = vpop.f32.mrf.mxu0
  %v515 = vadd.f32 %v96, %v514
  %v516 = vpop.f32.mrf.mxu0
  %517 = vdwg.mxu0
  %518 = vmatpush.bf16.msra.mxu0 %v362
  %519 = vmatpush.bf16.msra.mxu0 %v358
  %520 = vmatpush.bf16.msra.mxu0 %v354
  %521 = vmatpush.bf16.msra.mxu0 %v350
  %522 = vmatpush.bf16.msra.mxu0 %v346
  %523 = vmatpush.bf16.msra.mxu0 %v342
  %524 = vmatpush.bf16.msra.mxu0 %v338
  %525 = vmatpush.bf16.msra.mxu0 %v334
  %526 = vmatmul.bf16.gmra.mxu0 %v104
  %v527 = vpop.f32.mrf.mxu0
  %v528 = vadd.f32 %v515, %v527
  %v529 = vpop.f32.mrf.mxu0
  %530 = vdwg.mxu0
  %v531 = vmax.f32 %v450, 0.0
  %v532 = vmax.f32 %v476, 0.0
  %v533 = vmax.f32 %v502, 0.0
  %v534 = vmax.f32 %v528, 0.0
  %v535 = vpack.c.bf16 %v531, %v531
  %v536 = vpack.c.bf16 %v532, %v532
  %v537 = vpack.c.bf16 %v533, %v533
  %v538 = vpack.c.bf16 %v534, %v534
  %v539 = vld [vmem:[%s3] sm:$0xff]
  %v540 = vld [vmem:[%s3 + $0x8] sm:$0xff]
  %v541 = vld [vmem:[%s3 + $0x10] sm:$0xff]
  %v542 = vld [vmem:[%s3 + $0x18] sm:$0xff]
  %v543 = vld [vmem:[%s3 + $0x20] sm:$0xff]
  %v544 = vld [vmem:[%s3 + $0x28] sm:$0xff]
  %v545 = vld [vmem:[%s3 + $0x30] sm:$0xff]
  %v546 = vld [vmem:[%s3 + $0x38] sm:$0xff]
  %v547 = vld [vmem:[%s3 + $0x40] sm:$0xff]
  %v548 = vld [vmem:[%s3 + $0x48] sm:$0xff]
  %v549 = vld [vmem:[%s3 + $0x50] sm:$0xff]
  %v550 = vld [vmem:[%s3 + $0x58] sm:$0xff]
  %v551 = vld [vmem:[%s3 + $0x60] sm:$0xff]
  %v552 = vld [vmem:[%s3 + $0x68] sm:$0xff]
  %v553 = vld [vmem:[%s3 + $0x70] sm:$0xff]
  %v554 = vld [vmem:[%s3 + $0x78] sm:$0xff]
  %v555 = vld [vmem:[%s3 + $0x80] sm:$0xff]
  %v556 = vld [vmem:[%s3 + $0x88] sm:$0xff]
  %v557 = vld [vmem:[%s3 + $0x90] sm:$0xff]
  %v558 = vld [vmem:[%s3 + $0x98] sm:$0xff]
  %v559 = vld [vmem:[%s3 + $0xa0] sm:$0xff]
  %v560 = vld [vmem:[%s3 + $0xa8] sm:$0xff]
  %v561 = vld [vmem:[%s3 + $0xb0] sm:$0xff]
  %v562 = vld [vmem:[%s3 + $0xb8] sm:$0xff]
  %v563 = vld [vmem:[%s3 + $0xc0] sm:$0xff]
  %v564 = vld [vmem:[%s3 + $0xc8] sm:$0xff]
  %v565 = vld [vmem:[%s3 + $0xd0] sm:$0xff]
  %v566 = vld [vmem:[%s3 + $0xd8] sm:$0xff]
  %v567 = vld [vmem:[%s3 + $0xe0] sm:$0xff]
  %v568 = vld [vmem:[%s3 + $0xe8] sm:$0xff]
  %v569 = vld [vmem:[%s3 + $0xf0] sm:$0xff]
  %v570 = vld [vmem:[%s3 + $0xf8] sm:$0xff]
  %v571 = vld [vmem:[%s3 + $0x100] sm:$0xff]
  %v572 = vld [vmem:[%s3 + $0x108] sm:$0xff]
  %v573 = vld [vmem:[%s3 + $0x110] sm:$0xff]
  %v574 = vld [vmem:[%s3 + $0x118] sm:$0xff]
  %v575 = vld [vmem:[%s3 + $0x120] sm:$0xff]
  %v576 = vld [vmem:[%s3 + $0x128] sm:$0xff]
  %v577 = vld [vmem:[%s3 + $0x130] sm:$0xff]
  %v578 = vld [vmem:[%s3 + $0x138] sm:$0xff]
  %v579 = vld [vmem:[%s3 + $0x140] sm:$0xff]
  %v580 = vld [vmem:[%s3 + $0x148] sm:$0xff]
  %v581 = vld [vmem:[%s3 + $0x150] sm:$0xff]
  %v582 = vld [vmem:[%s3 + $0x158] sm:$0xff]
  %v583 = vld [vmem:[%s3 + $0x160] sm:$0xff]
  %v584 = vld [vmem:[%s3 + $0x168] sm:$0xff]
  %v585 = vld [vmem:[%s3 + $0x170] sm:$0xff]
  %v586 = vld [vmem:[%s3 + $0x178] sm:$0xff]
  %v587 = vld [vmem:[%s3 + $0x180] sm:$0xff]
  %v588 = vld [vmem:[%s3 + $0x188] sm:$0xff]
  %v589 = vld [vmem:[%s3 + $0x190] sm:$0xff]
  %v590 = vld [vmem:[%s3 + $0x198] sm:$0xff]
  %v591 = vld [vmem:[%s3 + $0x1a0] sm:$0xff]
  %v592 = vld [vmem:[%s3 + $0x1a8] sm:$0xff]
  %v593 = vld [vmem:[%s3 + $0x1b0] sm:$0xff]
  %v594 = vld [vmem:[%s3 + $0x1b8] sm:$0xff]
  %v595 = vld [vmem:[%s3 + $0x1c0] sm:$0xff]
  %v596 = vld [vmem:[%s3 + $0x1c8] sm:$0xff]
  %v597 = vld [vmem:[%s3 + $0x1d0] sm:$0xff]
  %v598 = vld [vmem:[%s3 + $0x1d8] sm:$0xff]
  %v599 = vld [vmem:[%s3 + $0x1e0] sm:$0xff]
  %v600 = vld [vmem:[%s3 + $0x1e8] sm:$0xff]
  %v601 = vld [vmem:[%s3 + $0x1f0] sm:$0xff]
  %v602 = vld [vmem:[%s3 + $0x1f8] sm:$0xff]
  %v603 = vld [vmem:[%s4] sm:$0x3]
  %v605 = vperm.slane %v603, 0
  %v606 = vperm.slane %v603, 1
  %v673 = vunpack.c.l.b16 %v539
  %v674 = vunpack.c.h.b16 %v539
  %v675 = vunpack.c.l.b16 %v540
  %v676 = vunpack.c.h.b16 %v540
  %v677 = vunpack.c.l.b16 %v541
  %v678 = vunpack.c.h.b16 %v541
  %v679 = vunpack.c.l.b16 %v542
  %v680 = vunpack.c.h.b16 %v542
  %v681 = vunpack.c.l.b16 %v543
  %v682 = vunpack.c.h.b16 %v543
  %v683 = vunpack.c.l.b16 %v544
  %v684 = vunpack.c.h.b16 %v544
  %v685 = vunpack.c.l.b16 %v545
  %v686 = vunpack.c.h.b16 %v545
  %v687 = vunpack.c.l.b16 %v546
  %v688 = vunpack.c.h.b16 %v546
  %v689 = vunpack.c.l.b16 %v547
  %v690 = vunpack.c.h.b16 %v547
  %v691 = vunpack.c.l.b16 %v548
  %v692 = vunpack.c.h.b16 %v548
  %v693 = vunpack.c.l.b16 %v549
  %v694 = vunpack.c.h.b16 %v549
  %v695 = vunpack.c.l.b16 %v550
  %v696 = vunpack.c.h.b16 %v550
  %v697 = vunpack.c.l.b16 %v551
  %v698 = vunpack.c.h.b16 %v551
  %v699 = vunpack.c.l.b16 %v552
  %v700 = vunpack.c.h.b16 %v552
  %v701 = vunpack.c.l.b16 %v553
  %v702 = vunpack.c.h.b16 %v553
  %v703 = vunpack.c.l.b16 %v554
  %v704 = vunpack.c.h.b16 %v554
  %v705 = vunpack.c.l.b16 %v555
  %v706 = vunpack.c.h.b16 %v555
  %v707 = vunpack.c.l.b16 %v556
  %v708 = vunpack.c.h.b16 %v556
  %v709 = vunpack.c.l.b16 %v557
  %v710 = vunpack.c.h.b16 %v557
  %v711 = vunpack.c.l.b16 %v558
  %v712 = vunpack.c.h.b16 %v558
  %v713 = vunpack.c.l.b16 %v559
  %v714 = vunpack.c.h.b16 %v559
  %v715 = vunpack.c.l.b16 %v560
  %v716 = vunpack.c.h.b16 %v560
  %v717 = vunpack.c.l.b16 %v561
  %v718 = vunpack.c.h.b16 %v561
  %v719 = vunpack.c.l.b16 %v562
  %v720 = vunpack.c.h.b16 %v562
  %v721 = vunpack.c.l.b16 %v563
  %v722 = vunpack.c.h.b16 %v563
  %v723 = vunpack.c.l.b16 %v564
  %v724 = vunpack.c.h.b16 %v564
  %v725 = vunpack.c.l.b16 %v565
  %v726 = vunpack.c.h.b16 %v565
  %v727 = vunpack.c.l.b16 %v566
  %v728 = vunpack.c.h.b16 %v566
  %v729 = vunpack.c.l.b16 %v567
  %v730 = vunpack.c.h.b16 %v567
  %v731 = vunpack.c.l.b16 %v568
  %v732 = vunpack.c.h.b16 %v568
  %v733 = vunpack.c.l.b16 %v569
  %v734 = vunpack.c.h.b16 %v569
  %v735 = vunpack.c.l.b16 %v570
  %v736 = vunpack.c.h.b16 %v570
  %v737 = vunpack.c.l.b16 %v571
  %v738 = vunpack.c.h.b16 %v571
  %v739 = vunpack.c.l.b16 %v572
  %v740 = vunpack.c.h.b16 %v572
  %v741 = vunpack.c.l.b16 %v573
  %v742 = vunpack.c.h.b16 %v573
  %v743 = vunpack.c.l.b16 %v574
  %v744 = vunpack.c.h.b16 %v574
  %v745 = vunpack.c.l.b16 %v575
  %v746 = vunpack.c.h.b16 %v575
  %v747 = vunpack.c.l.b16 %v576
  %v748 = vunpack.c.h.b16 %v576
  %v749 = vunpack.c.l.b16 %v577
  %v750 = vunpack.c.h.b16 %v577
  %v751 = vunpack.c.l.b16 %v578
  %v752 = vunpack.c.h.b16 %v578
  %v753 = vunpack.c.l.b16 %v579
  %v754 = vunpack.c.h.b16 %v579
  %v755 = vunpack.c.l.b16 %v580
  %v756 = vunpack.c.h.b16 %v580
  %v757 = vunpack.c.l.b16 %v581
  %v758 = vunpack.c.h.b16 %v581
  %v759 = vunpack.c.l.b16 %v582
  %v760 = vunpack.c.h.b16 %v582
  %v761 = vunpack.c.l.b16 %v583
  %v762 = vunpack.c.h.b16 %v583
  %v763 = vunpack.c.l.b16 %v584
  %v764 = vunpack.c.h.b16 %v584
  %v765 = vunpack.c.l.b16 %v585
  %v766 = vunpack.c.h.b16 %v585
  %v767 = vunpack.c.l.b16 %v586
  %v768 = vunpack.c.h.b16 %v586
  %v769 = vunpack.c.l.b16 %v587
  %v770 = vunpack.c.h.b16 %v587
  %v771 = vunpack.c.l.b16 %v588
  %v772 = vunpack.c.h.b16 %v588
  %v773 = vunpack.c.l.b16 %v589
  %v774 = vunpack.c.h.b16 %v589
  %v775 = vunpack.c.l.b16 %v590
  %v776 = vunpack.c.h.b16 %v590
  %v777 = vunpack.c.l.b16 %v591
  %v778 = vunpack.c.h.b16 %v591
  %v779 = vunpack.c.l.b16 %v592
  %v780 = vunpack.c.h.b16 %v592
  %v781 = vunpack.c.l.b16 %v593
  %v782 = vunpack.c.h.b16 %v593
  %v783 = vunpack.c.l.b16 %v594
  %v784 = vunpack.c.h.b16 %v594
  %v785 = vunpack.c.l.b16 %v595
  %v786 = vunpack.c.h.b16 %v595
  %v787 = vunpack.c.l.b16 %v596
  %v788 = vunpack.c.h.b16 %v596
  %v789 = vunpack.c.l.b16 %v597
  %v790 = vunpack.c.h.b16 %v597
  %v791 = vunpack.c.l.b16 %v598
  %v792 = vunpack.c.h.b16 %v598
  %v793 = vunpack.c.l.b16 %v599
  %v794 = vunpack.c.h.b16 %v599
  %v795 = vunpack.c.l.b16 %v600
  %v796 = vunpack.c.h.b16 %v600
  %v797 = vunpack.c.l.b16 %v601
  %v798 = vunpack.c.h.b16 %v601
  %v799 = vunpack.c.l.b16 %v602
  %v800 = vunpack.c.h.b16 %v602
  %v801 = vpack.c.b16 %v675, %v673
  %v802 = vpack.c.b16 %v676, %v674
  %v803 = vpack.c.b16 %v679, %v677
  %v804 = vpack.c.b16 %v680, %v678
  %v805 = vpack.c.b16 %v683, %v681
  %v806 = vpack.c.b16 %v684, %v682
  %v807 = vpack.c.b16 %v687, %v685
  %v808 = vpack.c.b16 %v688, %v686
  %v809 = vpack.c.b16 %v691, %v689
  %v810 = vpack.c.b16 %v692, %v690
  %v811 = vpack.c.b16 %v695, %v693
  %v812 = vpack.c.b16 %v696, %v694
  %v813 = vpack.c.b16 %v699, %v697
  %v814 = vpack.c.b16 %v700, %v698
  %v815 = vpack.c.b16 %v703, %v701
  %v816 = vpack.c.b16 %v704, %v702
  %v817 = vpack.c.b16 %v707, %v705
  %v818 = vpack.c.b16 %v708, %v706
  %v819 = vpack.c.b16 %v711, %v709
  %v820 = vpack.c.b16 %v712, %v710
  %v821 = vpack.c.b16 %v715, %v713
  %v822 = vpack.c.b16 %v716, %v714
  %v823 = vpack.c.b16 %v719, %v717
  %v824 = vpack.c.b16 %v720, %v718
  %v825 = vpack.c.b16 %v723, %v721
  %v826 = vpack.c.b16 %v724, %v722
  %v827 = vpack.c.b16 %v727, %v725
  %v828 = vpack.c.b16 %v728, %v726
  %v829 = vpack.c.b16 %v731, %v729
  %v830 = vpack.c.b16 %v732, %v730
  %v831 = vpack.c.b16 %v735, %v733
  %v832 = vpack.c.b16 %v736, %v734
  %v833 = vpack.c.b16 %v739, %v737
  %v834 = vpack.c.b16 %v740, %v738
  %v835 = vpack.c.b16 %v743, %v741
  %v836 = vpack.c.b16 %v744, %v742
  %v837 = vpack.c.b16 %v747, %v745
  %v838 = vpack.c.b16 %v748, %v746
  %v839 = vpack.c.b16 %v751, %v749
  %v840 = vpack.c.b16 %v752, %v750
  %v841 = vpack.c.b16 %v755, %v753
  %v842 = vpack.c.b16 %v756, %v754
  %v843 = vpack.c.b16 %v759, %v757
  %v844 = vpack.c.b16 %v760, %v758
  %v845 = vpack.c.b16 %v763, %v761
  %v846 = vpack.c.b16 %v764, %v762
  %v847 = vpack.c.b16 %v767, %v765
  %v848 = vpack.c.b16 %v768, %v766
  %v849 = vpack.c.b16 %v771, %v769
  %v850 = vpack.c.b16 %v772, %v770
  %v851 = vpack.c.b16 %v775, %v773
  %v852 = vpack.c.b16 %v776, %v774
  %v853 = vpack.c.b16 %v779, %v777
  %v854 = vpack.c.b16 %v780, %v778
  %v855 = vpack.c.b16 %v783, %v781
  %v856 = vpack.c.b16 %v784, %v782
  %v857 = vpack.c.b16 %v787, %v785
  %v858 = vpack.c.b16 %v788, %v786
  %v859 = vpack.c.b16 %v791, %v789
  %v860 = vpack.c.b16 %v792, %v790
  %v861 = vpack.c.b16 %v795, %v793
  %v862 = vpack.c.b16 %v796, %v794
  %v863 = vpack.c.b16 %v799, %v797
  %v864 = vpack.c.b16 %v800, %v798
  %929 = vmatpush.bf16.msra.mxu0 %v815
  %930 = vmatpush.bf16.msra.mxu0 %v813
  %931 = vmatpush.bf16.msra.mxu0 %v811
  %932 = vmatpush.bf16.msra.mxu0 %v809
  %933 = vmatpush.bf16.msra.mxu0 %v807
  %934 = vmatpush.bf16.msra.mxu0 %v805
  %935 = vmatpush.bf16.msra.mxu0 %v803
  %936 = vmatpush.bf16.msra.mxu0 %v801
  %937 = vmatmul.bf16.gmra.mxu0 %v535
  %v938 = vpop.f32.mrf.mxu0
  %v939 = vadd.f32 %v605, %v938
  %v940 = vpop.f32.mrf.mxu0
  %941 = vdwg.mxu0
  %942 = vmatpush.bf16.msra.mxu0 %v831
  %943 = vmatpush.bf16.msra.mxu0 %v829
  %944 = vmatpush.bf16.msra.mxu0 %v827
  %945 = vmatpush.bf16.msra.mxu0 %v825
  %946 = vmatpush.bf16.msra.mxu0 %v823
  %947 = vmatpush.bf16.msra.mxu0 %v821
  %948 = vmatpush.bf16.msra.mxu0 %v819
  %949 = vmatpush.bf16.msra.mxu0 %v817
  %950 = vmatmul.bf16.gmra.mxu0 %v536
  %v951 = vpop.f32.mrf.mxu0
  %v952 = vadd.f32 %v939, %v951
  %v953 = vpop.f32.mrf.mxu0
  %954 = vdwg.mxu0
  %955 = vmatpush.bf16.msra.mxu0 %v847
  %956 = vmatpush.bf16.msra.mxu0 %v845
  %957 = vmatpush.bf16.msra.mxu0 %v843
  %958 = vmatpush.bf16.msra.mxu0 %v841
  %959 = vmatpush.bf16.msra.mxu0 %v839
  %960 = vmatpush.bf16.msra.mxu0 %v837
  %961 = vmatpush.bf16.msra.mxu0 %v835
  %962 = vmatpush.bf16.msra.mxu0 %v833
  %963 = vmatmul.bf16.gmra.mxu0 %v537
  %v964 = vpop.f32.mrf.mxu0
  %v965 = vadd.f32 %v952, %v964
  %v966 = vpop.f32.mrf.mxu0
  %967 = vdwg.mxu0
  %968 = vmatpush.bf16.msra.mxu0 %v863
  %969 = vmatpush.bf16.msra.mxu0 %v861
  %970 = vmatpush.bf16.msra.mxu0 %v859
  %971 = vmatpush.bf16.msra.mxu0 %v857
  %972 = vmatpush.bf16.msra.mxu0 %v855
  %973 = vmatpush.bf16.msra.mxu0 %v853
  %974 = vmatpush.bf16.msra.mxu0 %v851
  %975 = vmatpush.bf16.msra.mxu0 %v849
  %976 = vmatmul.bf16.gmra.mxu0 %v538
  %v977 = vpop.f32.mrf.mxu0
  %v978 = vadd.f32 %v965, %v977
  %v979 = vpop.f32.mrf.mxu0
  %980 = vdwg.mxu0
  %981 = vmatpush.bf16.msra.mxu0 %v816
  %982 = vmatpush.bf16.msra.mxu0 %v814
  %983 = vmatpush.bf16.msra.mxu0 %v812
  %984 = vmatpush.bf16.msra.mxu0 %v810
  %985 = vmatpush.bf16.msra.mxu0 %v808
  %986 = vmatpush.bf16.msra.mxu0 %v806
  %987 = vmatpush.bf16.msra.mxu0 %v804
  %988 = vmatpush.bf16.msra.mxu0 %v802
  %989 = vmatmul.bf16.gmra.mxu0 %v535
  %v990 = vpop.f32.mrf.mxu0
  %v991 = vadd.f32 %v606, %v990
  %v992 = vpop.f32.mrf.mxu0
  %993 = vdwg.mxu0
  %994 = vmatpush.bf16.msra.mxu0 %v832
  %995 = vmatpush.bf16.msra.mxu0 %v830
  %996 = vmatpush.bf16.msra.mxu0 %v828
  %997 = vmatpush.bf16.msra.mxu0 %v826
  %998 = vmatpush.bf16.msra.mxu0 %v824
  %999 = vmatpush.bf16.msra.mxu0 %v822
  %1000 = vmatpush.bf16.msra.mxu0 %v820
  %1001 = vmatpush.bf16.msra.mxu0 %v818
  %1002 = vmatmul.bf16.gmra.mxu0 %v536
  %v1003 = vpop.f32.mrf.mxu0
  %v1004 = vadd.f32 %v991, %v1003
  %v1005 = vpop.f32.mrf.mxu0
  %1006 = vdwg.mxu0
  %1007 = vmatpush.bf16.msra.mxu0 %v848
  %1008 = vmatpush.bf16.msra.mxu0 %v846
  %1009 = vmatpush.bf16.msra.mxu0 %v844
  %1010 = vmatpush.bf16.msra.mxu0 %v842
  %1011 = vmatpush.bf16.msra.mxu0 %v840
  %1012 = vmatpush.bf16.msra.mxu0 %v838
  %1013 = vmatpush.bf16.msra.mxu0 %v836
  %1014 = vmatpush.bf16.msra.mxu0 %v834
  %1015 = vmatmul.bf16.gmra.mxu0 %v537
  %v1016 = vpop.f32.mrf.mxu0
  %v1017 = vadd.f32 %v1004, %v1016
  %v1018 = vpop.f32.mrf.mxu0
  %1019 = vdwg.mxu0
  %1020 = vmatpush.bf16.msra.mxu0 %v864
  %1021 = vmatpush.bf16.msra.mxu0 %v862
  %1022 = vmatpush.bf16.msra.mxu0 %v860
  %1023 = vmatpush.bf16.msra.mxu0 %v858
  %1024 = vmatpush.bf16.msra.mxu0 %v856
  %1025 = vmatpush.bf16.msra.mxu0 %v854
  %1026 = vmatpush.bf16.msra.mxu0 %v852
  %1027 = vmatpush.bf16.msra.mxu0 %v850
  %1028 = vmatmul.bf16.gmra.mxu0 %v538
  %v1029 = vpop.f32.mrf.mxu0
  %v1030 = vadd.f32 %v1017, %v1029
  %v1031 = vpop.f32.mrf.mxu0
  %1032 = vdwg.mxu0
  %v1033 = vmax.f32 %v978, 0.0
  %v1034 = vmax.f32 %v1030, 0.0
  %v1035 = vpack.c.bf16 %v1033, %v1033
  %v1036 = vpack.c.bf16 %v1034, %v1034
  %v1037 = vld [vmem:[%s5] sm:$0xf]
  %v1038 = vld [vmem:[%s5 + $0x4] sm:$0xf]
  %v1039 = vld [vmem:[%s5 + $0x8] sm:$0xf]
  %v1040 = vld [vmem:[%s5 + $0xc] sm:$0xf]
  %v1041 = vld [vmem:[%s5 + $0x10] sm:$0xf]
  %v1042 = vld [vmem:[%s5 + $0x14] sm:$0xf]
  %v1043 = vld [vmem:[%s5 + $0x18] sm:$0xf]
  %v1044 = vld [vmem:[%s5 + $0x1c] sm:$0xf]
  %v1045 = vld [vmem:[%s5 + $0x20] sm:$0xf]
  %v1046 = vld [vmem:[%s5 + $0x24] sm:$0xf]
  %v1047 = vld [vmem:[%s5 + $0x28] sm:$0xf]
  %v1048 = vld [vmem:[%s5 + $0x2c] sm:$0xf]
  %v1049 = vld [vmem:[%s5 + $0x30] sm:$0xf]
  %v1050 = vld [vmem:[%s5 + $0x34] sm:$0xf]
  %v1051 = vld [vmem:[%s5 + $0x38] sm:$0xf]
  %v1052 = vld [vmem:[%s5 + $0x3c] sm:$0xf]
  %v1053 = vld [vmem:[%s5 + $0x40] sm:$0xf]
  %v1054 = vld [vmem:[%s5 + $0x44] sm:$0xf]
  %v1055 = vld [vmem:[%s5 + $0x48] sm:$0xf]
  %v1056 = vld [vmem:[%s5 + $0x4c] sm:$0xf]
  %v1057 = vld [vmem:[%s5 + $0x50] sm:$0xf]
  %v1058 = vld [vmem:[%s5 + $0x54] sm:$0xf]
  %v1059 = vld [vmem:[%s5 + $0x58] sm:$0xf]
  %v1060 = vld [vmem:[%s5 + $0x5c] sm:$0xf]
  %v1061 = vld [vmem:[%s5 + $0x60] sm:$0xf]
  %v1062 = vld [vmem:[%s5 + $0x64] sm:$0xf]
  %v1063 = vld [vmem:[%s5 + $0x68] sm:$0xf]
  %v1064 = vld [vmem:[%s5 + $0x6c] sm:$0xf]
  %v1065 = vld [vmem:[%s5 + $0x70] sm:$0xf]
  %v1066 = vld [vmem:[%s5 + $0x74] sm:$0xf]
  %v1067 = vld [vmem:[%s5 + $0x78] sm:$0xf]
  %v1068 = vld [vmem:[%s5 + $0x7c] sm:$0xf]
  %v1069 = vld [vmem:[%s6] sm:$0x1]
  %v1071 = vperm.slane %v1069, 0
  %v1105 = vunpack.c.l.b16 %v1037
  %v1106 = vunpack.c.l.b16 %v1038
  %v1107 = vunpack.c.l.b16 %v1039
  %v1108 = vunpack.c.l.b16 %v1040
  %v1109 = vunpack.c.l.b16 %v1041
  %v1110 = vunpack.c.l.b16 %v1042
  %v1111 = vunpack.c.l.b16 %v1043
  %v1112 = vunpack.c.l.b16 %v1044
  %v1113 = vunpack.c.l.b16 %v1045
  %v1114 = vunpack.c.l.b16 %v1046
  %v1115 = vunpack.c.l.b16 %v1047
  %v1116 = vunpack.c.l.b16 %v1048
  %v1117 = vunpack.c.l.b16 %v1049
  %v1118 = vunpack.c.l.b16 %v1050
  %v1119 = vunpack.c.l.b16 %v1051
  %v1120 = vunpack.c.l.b16 %v1052
  %v1121 = vunpack.c.l.b16 %v1053
  %v1122 = vunpack.c.l.b16 %v1054
  %v1123 = vunpack.c.l.b16 %v1055
  %v1124 = vunpack.c.l.b16 %v1056
  %v1125 = vunpack.c.l.b16 %v1057
  %v1126 = vunpack.c.l.b16 %v1058
  %v1127 = vunpack.c.l.b16 %v1059
  %v1128 = vunpack.c.l.b16 %v1060
  %v1129 = vunpack.c.l.b16 %v1061
  %v1130 = vunpack.c.l.b16 %v1062
  %v1131 = vunpack.c.l.b16 %v1063
  %v1132 = vunpack.c.l.b16 %v1064
  %v1133 = vunpack.c.l.b16 %v1065
  %v1134 = vunpack.c.l.b16 %v1066
  %v1135 = vunpack.c.l.b16 %v1067
  %v1136 = vunpack.c.l.b16 %v1068
  %v1137 = vpack.c.b16 %v1106, %v1105
  %v1138 = vpack.c.b16 %v1108, %v1107
  %v1139 = vpack.c.b16 %v1110, %v1109
  %v1140 = vpack.c.b16 %v1112, %v1111
  %v1141 = vpack.c.b16 %v1114, %v1113
  %v1142 = vpack.c.b16 %v1116, %v1115
  %v1143 = vpack.c.b16 %v1118, %v1117
  %v1144 = vpack.c.b16 %v1120, %v1119
  %v1145 = vpack.c.b16 %v1122, %v1121
  %v1146 = vpack.c.b16 %v1124, %v1123
  %v1147 = vpack.c.b16 %v1126, %v1125
  %v1148 = vpack.c.b16 %v1128, %v1127
  %v1149 = vpack.c.b16 %v1130, %v1129
  %v1150 = vpack.c.b16 %v1132, %v1131
  %v1151 = vpack.c.b16 %v1134, %v1133
  %v1152 = vpack.c.b16 %v1136, %v1135
  %1169 = vmatpush.bf16.msra.mxu0 %v1144
  %1170 = vmatpush.bf16.msra.mxu0 %v1143
  %1171 = vmatpush.bf16.msra.mxu0 %v1142
  %1172 = vmatpush.bf16.msra.mxu0 %v1141
  %1173 = vmatpush.bf16.msra.mxu0 %v1140
  %1174 = vmatpush.bf16.msra.mxu0 %v1139
  %1175 = vmatpush.bf16.msra.mxu0 %v1138
  %1176 = vmatpush.bf16.msra.mxu0 %v1137
  %1177 = vmatmul.bf16.gmra.mxu0 %v1035
  %v1178 = vpop.f32.mrf.mxu0
  %v1179 = vadd.f32 %v1071, %v1178
  %v1180 = vpop.f32.mrf.mxu0
  %1181 = vdwg.mxu0
  %1182 = vmatpush.bf16.msra.mxu0 %v1152
  %1183 = vmatpush.bf16.msra.mxu0 %v1151
  %1184 = vmatpush.bf16.msra.mxu0 %v1150
  %1185 = vmatpush.bf16.msra.mxu0 %v1149
  %1186 = vmatpush.bf16.msra.mxu0 %v1148
  %1187 = vmatpush.bf16.msra.mxu0 %v1147
  %1188 = vmatpush.bf16.msra.mxu0 %v1146
  %1189 = vmatpush.bf16.msra.mxu0 %v1145
  %1190 = vmatmul.bf16.gmra.mxu0 %v1036
  %v1191 = vpop.f32.mrf.mxu0
  %v1192 = vadd.f32 %v1179, %v1191
  %v1193 = vpop.f32.mrf.mxu0
  %1194 = vdwg.mxu0
  %1195 = vst [vmem:[%s7] sm:$0x3] %v1192
  // Predicated region
  $region30: #{feed_forward.1} parent=0 // pred_check
    _
  $region31: #{feed_forward.1} parent=0 // pred_check_branch
    %1197 = sbr.rel (0) target = $region33
  $region32: #{feed_forward.1} parent=0 // pred_region
    _
  $region33: #{feed_forward.1} parent=0 // pred_fallthru
    _
  // Predicated region
  $region34: #{feed_forward.1} parent=0 // pred_check
    _
  $region35: #{feed_forward.1} parent=0 // pred_check_branch
    %1199 = sbr.rel (0) target = $region37
  $region36: #{feed_forward.1} parent=0 // pred_region
    _
  $region37: #{feed_forward.1} parent=0 // pred_fallthru
    _

</llo_original>
